<compile_context>
chip_gen: v6e
topology: v6e:2x2x1
jax: 0.10.0
libtpu: 0.0.40
codegen_flags: <defaults>
</compile_context>

<pallas_src>
import functools
import math

import jax
import jax.numpy as jnp
from jax.experimental import pallas as pl
from jax.experimental.pallas import tpu as pltpu


# ----------------------------------------------------------------------------
# Tile-size helper: largest divisor of `n` that is <= target and aligned to one
# of the preferred alignments, falling back to the full dim (full-dim blocks
# always satisfy TPU tiling).
# ----------------------------------------------------------------------------
def _pick_tile(n, target, aligns=(8,)):
    if n <= target:
        return n
    for align in aligns:
        for t in range(min(target, n), align - 1, -1):
            if n % t == 0 and t % align == 0:
                return t
    # TODO(synk): pad the array instead of falling back to a full-dim block.
    return n


# ----------------------------------------------------------------------------
# Tiled projection matmul:  y = x @ w_t   with w_t stored as (K, N)
# ----------------------------------------------------------------------------
def _matmul_kernel(x_ref, w_ref, o_ref, acc_ref):
    @pl.when(pl.program_id(2) == 0)
    def _():
        acc_ref[...] = jnp.zeros_like(acc_ref)

    acc_ref[...] += jnp.dot(
        x_ref[...], w_ref[...], preferred_element_type=jnp.float32
    )

    @pl.when(pl.program_id(2) == pl.num_programs(2) - 1)
    def _():
        o_ref[...] = acc_ref[...].astype(o_ref.dtype)


def pallas_linear(x, w_t, out_dtype=None, tm_target=512, tn_target=512, tk_target=512):
    """y = x @ w_t with w_t: (in, out) (pre-transposed nn.Linear weight)."""
    orig_shape = x.shape
    K = orig_shape[-1]
    N = w_t.shape[1]
    out_dtype = out_dtype or x.dtype

    x2d = x.reshape(-1, K).astype(w_t.dtype)        # bf16 on the MXU path
    M = x2d.shape[0]

    tm = _pick_tile(M, tm_target, aligns=(16, 8))    # second-minor: prefer bf16 sublane pack
    tn = _pick_tile(N, tn_target, aligns=(128,))     # minor dims: mult of 128 (or full)
    tk = _pick_tile(K, tk_target, aligns=(128,))

    y = pl.pallas_call(
        _matmul_kernel,
        out_shape=jax.ShapeDtypeStruct((M, N), out_dtype),
        grid_spec=pltpu.PrefetchScalarGridSpec(
            num_scalar_prefetch=0,
            grid=(M // tm, N // tn, K // tk),
            in_specs=[
                pl.BlockSpec((tm, tk), lambda i, j, k: (i, k)),
                pl.BlockSpec((tk, tn), lambda i, j, k: (k, j)),
            ],
            out_specs=pl.BlockSpec((tm, tn), lambda i, j, k: (i, j)),
            scratch_shapes=[pltpu.VMEM((tm, tn), jnp.float32)],
        ),
        compiler_params=pltpu.CompilerParams(
            dimension_semantics=("parallel", "parallel", "arbitrary"),
            vmem_limit_bytes=48 * 1024 * 1024,   # stays within v7x's 64 MiB physical VMEM
        ),
    )(x2d, w_t)
    return y.reshape(*orig_shape[:-1], N)


# ----------------------------------------------------------------------------
# Flash attention with GQA: q (B, H_kv, n_rep, S, D); k/v (B, H_kv, L, D)
# ----------------------------------------------------------------------------
def _flash_attn_kernel(q_ref, k_ref, v_ref, o_ref, m_sc, l_sc, acc_sc, *,
                       scale, causal, start_pos, tq, tk, n_rep, head_dim):
    qi = pl.program_id(2)
    ki = pl.program_id(3)
    rows = n_rep * tq

    @pl.when(ki == 0)
    def _init():
        m_sc[...] = jnp.full_like(m_sc, -1e30)
        l_sc[...] = jnp.zeros_like(l_sc)
        acc_sc[...] = jnp.zeros_like(acc_sc)

    def process(masked):
        # (n_rep, tq, D) -> (n_rep*tq, D): free leading-dim collapse; one big
        # matmul per KV tile instead of n_rep small batched ones.
        q = q_ref[0, 0].reshape(rows, head_dim)
        # Fold the softmax scale into q once ((rows, D) mul, not (rows, tk)).
        q = q * jnp.asarray(scale, dtype=q.dtype)
        k = k_ref[0, 0]                              # (tk, D) bf16
        v = v_ref[0, 0]                              # (tk, D) bf16

        # s = q @ k^T  -> (rows, tk), f32 accumulation on the MXU.
        s = jax.lax.dot_general(q, k, (((1,), (1,)), ((), ())),
                                preferred_element_type=jnp.float32)

        if masked:
            # Mask built once at (tq, tk); broadcast over the n_rep heads.
            q_idx = jax.lax.broadcasted_iota(jnp.int32, (tq, tk), 0)
            k_idx = jax.lax.broadcasted_iota(jnp.int32, (tq, tk), 1)
            allowed2d = (ki * tk + k_idx) <= (start_pos + qi * tq + q_idx)
            s = jnp.where(allowed2d[None, :, :],
                          s.reshape(n_rep, tq, tk), -1e30).reshape(rows, tk)

        m_prev = m_sc[...]
        m_new = jnp.maximum(m_prev, jnp.max(s, axis=-1, keepdims=True))
        alpha = jnp.exp(m_prev - m_new)
        p = jnp.exp(s - m_new)
        if masked:
            # Guard fully-masked rows (only the diagonal tile ever needs this).
            p = jnp.where(allowed2d[None, :, :],
                          p.reshape(n_rep, tq, tk), 0.0).reshape(rows, tk)
        l_sc[...] = alpha * l_sc[...] + jnp.sum(p, axis=-1, keepdims=True)
        acc_sc[...] = alpha * acc_sc[...] + jnp.dot(
            p.astype(v.dtype), v, preferred_element_type=jnp.float32)
        m_sc[...] = m_new

    if causal:
        q_lo = start_pos + qi * tq           # first query position of this tile
        q_hi = q_lo + (tq - 1)               # last query position
        kv_lo = ki * tk
        kv_hi = kv_lo + (tk - 1)

        # Interior tile: every KV position visible to every query row -> no mask.
        @pl.when(jnp.logical_and(kv_lo <= q_hi, kv_hi <= q_lo))
        def _():
            process(masked=False)

        # Diagonal tile(s): partially masked.
        @pl.when(jnp.logical_and(kv_lo <= q_hi, kv_hi > q_lo))
        def _():
            process(masked=True)

        # Fully-future tiles (kv_lo > q_hi): skipped; their K/V block index is
        # clamped in the BlockSpec index_map so no DMA is issued for them.
    else:
        process(masked=False)

    @pl.when(ki == pl.num_programs(3) - 1)
    def _finalize():
        l = jnp.maximum(l_sc[...], 1e-30)        # avoid 0-division on masked rows
        inv_l = pl.reciprocal(l, approx=True)
        o_ref[0, 0] = (acc_sc[...] * inv_l).reshape(
            n_rep, tq, head_dim).astype(o_ref.dtype)


def pallas_flash_attention(q, keys, values, *, scale, causal, start_pos):
    """q: (B, H_kv, n_rep, S, D); keys/values: (B, H_kv, L, D) -> same layout as q."""
    B, Hkv, n_rep, S, D = q.shape
    L = keys.shape[2]
    tq = _pick_tile(S, 128, aligns=(16, 8))
    tk = _pick_tile(L, 256, aligns=(16, 8))

    kernel = functools.partial(
        _flash_attn_kernel, scale=scale, causal=causal,
        start_pos=start_pos, tq=tq, tk=tk, n_rep=n_rep, head_dim=D)

    if causal:
        # Clamp ki for fully-future tiles so skipped iterations return the same
        # block index as the previous step and Pallas elides the K/V DMA.
        def kv_index_map(b, h, qi, ki):
            last_blk = (start_pos + (qi + 1) * tq - 1) // tk
            return (b, h, jnp.minimum(ki, last_blk), 0)
    else:
        def kv_index_map(b, h, qi, ki):
            return (b, h, ki, 0)

    return pl.pallas_call(
        kernel,
        out_shape=jax.ShapeDtypeStruct((B, Hkv, n_rep, S, D), q.dtype),
        grid_spec=pltpu.PrefetchScalarGridSpec(
            num_scalar_prefetch=0,
            grid=(B, Hkv, S // tq, L // tk),
            in_specs=[
                pl.BlockSpec((1, 1, n_rep, tq, D),
                             lambda b, h, qi, ki: (b, h, 0, qi, 0)),
                pl.BlockSpec((1, 1, tk, D), kv_index_map),
                pl.BlockSpec((1, 1, tk, D), kv_index_map),
            ],
            out_specs=pl.BlockSpec((1, 1, n_rep, tq, D),
                                   lambda b, h, qi, ki: (b, h, 0, qi, 0)),
            scratch_shapes=[
                pltpu.VMEM((n_rep * tq, 1), jnp.float32),   # running max
                pltpu.VMEM((n_rep * tq, 1), jnp.float32),   # running sum
                pltpu.VMEM((n_rep * tq, D), jnp.float32),   # output accumulator
            ],
        ),
        compiler_params=pltpu.CompilerParams(
            dimension_semantics=("parallel", "parallel", "parallel", "arbitrary"),
            vmem_limit_bytes=48 * 1024 * 1024,
        ),
    )(q, keys, values)


# ----------------------------------------------------------------------------
# Plain-JAX glue (RoPE) matching the PyTorch semantics
# ----------------------------------------------------------------------------
def precompute_freqs_cis(dim, end, theta=500000.0):
    freqs = 1.0 / (theta ** (jnp.arange(0, dim, 2)[: dim // 2].astype(jnp.float32) / dim))
    t = jnp.arange(end, dtype=jnp.float32)
    angles = jnp.outer(t, freqs)
    return jnp.cos(angles), jnp.sin(angles)


def apply_rotary_emb(xq, xk, cos, sin):
    """xq: (B,S,Hq,D), xk: (B,S,Hk,D); cos/sin: (S, D//2). Complex rotation in f32."""
    # TODO(synk): fuse RoPE into the QKV-projection epilogue (with a
    # contiguous-half rotation via pre-permuted wq/wk columns) to save one
    # full HBM round trip of Q and K per layer.
    def rot(x):
        xf = x.astype(jnp.float32)
        xr = xf.reshape(*xf.shape[:-1], -1, 2)
        x_re, x_im = xr[..., 0], xr[..., 1]
        c = cos[None, :, None, :]
        s = sin[None, :, None, :]
        o_re = x_re * c - x_im * s
        o_im = x_re * s + x_im * c
        return jnp.stack([o_re, o_im], axis=-1).reshape(x.shape).astype(x.dtype)

    return rot(xq), rot(xk)


class Attention:
    def __init__(self, dim, n_heads, n_kv_heads, max_batch_size, max_seq_len, key,
                 param_dtype=jnp.bfloat16, cache_dtype=jnp.bfloat16):
        self.n_local_heads = n_heads
        self.n_local_kv_heads = n_kv_heads
        self.n_rep = n_heads // n_kv_heads
        self.head_dim = dim // n_heads
        k1, k2, k3, k4 = jax.random.split(key, 4)
        scale = 1.0 / math.sqrt(dim)
        # Weights stored PRE-TRANSPOSED (in_features, out_features), bf16.
        self.wq_t = (jax.random.normal(k1, (dim, n_heads * self.head_dim), jnp.float32) * scale).astype(param_dtype)
        self.wk_t = (jax.random.normal(k2, (dim, n_kv_heads * self.head_dim), jnp.float32) * scale).astype(param_dtype)
        self.wv_t = (jax.random.normal(k3, (dim, n_kv_heads * self.head_dim), jnp.float32) * scale).astype(param_dtype)
        self.wo_t = (jax.random.normal(k4, (n_heads * self.head_dim, dim), jnp.float32) * scale).astype(param_dtype)
        # Fused QKV weight: one projection kernel reads x once and produces a
        # single lane-dense output slab, sliced afterwards.
        self.wqkv_t = jnp.concatenate([self.wq_t, self.wk_t, self.wv_t], axis=1)
        # KV cache in (B, H_kv, max_seq, D) layout, bf16: attention reads it
        # directly via index_map (no repeat_kv, no full-cache transpose).
        # TODO(synk): fp8 cache on v7x / int8 on v6e with per-head scales for
        # decode; skip on v5e.
        self.cache_k = jnp.zeros((max_batch_size, n_kv_heads, max_seq_len, self.head_dim), cache_dtype)
        self.cache_v = jnp.zeros((max_batch_size, n_kv_heads, max_seq_len, self.head_dim), cache_dtype)

    def __call__(self, x, start_pos, cos, sin, causal=True):
        bsz, seqlen, _ = x.shape
        H, Hkv, D, n_rep = self.n_local_heads, self.n_local_kv_heads, self.head_dim, self.n_rep

        # Fused QKV projection (one tiled Pallas matmul, bf16 MXU, f32 accumulation)
        qkv = pallas_linear(x, self.wqkv_t, out_dtype=jnp.bfloat16)
        xq = qkv[..., : H * D].reshape(bsz, seqlen, H, D)
        xk = qkv[..., H * D: (H + Hkv) * D].reshape(bsz, seqlen, Hkv, D)
        xv = qkv[..., (H + Hkv) * D:].reshape(bsz, seqlen, Hkv, D)

        xq, xk = apply_rotary_emb(xq, xk, cos, sin)

        # Group query heads by their KV head: (B, H_kv, n_rep, S, D).
        # TODO(synk): read Q from (B,S,H,D) and write O back in (B,S,H,D) inside
        # the kernel to eliminate these XLA-side transposes (extra HBM passes).
        q = jnp.transpose(xq, (0, 2, 1, 3)).reshape(bsz, Hkv, n_rep, seqlen, D)
        xk_t = jnp.transpose(xk, (0, 2, 1, 3))   # (B, H_kv, S, D) — new tokens only
        xv_t = jnp.transpose(xv, (0, 2, 1, 3))

        if start_pos >= 0:
            # TODO(synk): jit the step fn with donated cache buffers and pass the
            # full cache + scalar-prefetched kv_len/start_pos so the update and
            # the prefix slice below stop copying the used cache every step.
            self.cache_k = jax.lax.dynamic_update_slice(
                self.cache_k, xk_t.astype(self.cache_k.dtype), (0, 0, start_pos, 0))
            self.cache_v = jax.lax.dynamic_update_slice(
                self.cache_v, xv_t.astype(self.cache_v.dtype), (0, 0, start_pos, 0))
            keys = self.cache_k[:bsz, :, : start_pos + seqlen]
            values = self.cache_v[:bsz, :, : start_pos + seqlen]
        else:
            keys = xk_t
            values = xv_t

        out = pallas_flash_attention(
            q, keys, values,
            scale=1.0 / math.sqrt(D),
            causal=causal,
            start_pos=max(start_pos, 0),
        )  # (B, H_kv, n_rep, S, D)

        out = out.reshape(bsz, H, seqlen, D)
        out = jnp.transpose(out, (0, 2, 1, 3)).reshape(bsz, seqlen, H * D)
        return pallas_linear(out, self.wo_t, out_dtype=x.dtype)


# ----------------------------------------------------------------------------
# Pure-JAX (XLA) reference of the same bf16 computation, for a sanity check.
# ----------------------------------------------------------------------------
def _reference_forward(attn, x, start_pos, cos, sin):
    f32 = jnp.float32
    b16 = lambda a: a.astype(jnp.bfloat16).astype(f32)
    bsz, seqlen, _ = x.shape
    H, Hkv, D, n_rep = attn.n_local_heads, attn.n_local_kv_heads, attn.head_dim, attn.n_rep

    xf = b16(x)
    wq, wk, wv, wo = (attn.wq_t.astype(f32), attn.wk_t.astype(f32),
                      attn.wv_t.astype(f32), attn.wo_t.astype(f32))
    xq = b16(xf @ wq).reshape(bsz, seqlen, H, D)
    xk = b16(xf @ wk).reshape(bsz, seqlen, Hkv, D)
    xv = b16(xf @ wv).reshape(bsz, seqlen, Hkv, D)
    xq, xk = apply_rotary_emb(xq, xk, cos, sin)
    xq, xk, xv = b16(xq), b16(xk), b16(xv)

    keys = jnp.repeat(xk, n_rep, axis=2)      # repeat_interleave (start_pos == 0 case)
    values = jnp.repeat(xv, n_rep, axis=2)
    q = jnp.transpose(xq, (0, 2, 1, 3))
    k = jnp.transpose(keys, (0, 2, 1, 3))
    v = jnp.transpose(values, (0, 2, 1, 3))
    L = k.shape[2]
    scores = jnp.einsum("bhqd,bhkd->bhqk", q, k) / math.sqrt(D)
    q_idx = jnp.arange(seqlen)[:, None] + max(start_pos, 0)
    k_idx = jnp.arange(L)[None, :]
    scores = jnp.where(k_idx <= q_idx, scores, -1e30)
    p = jax.nn.softmax(scores, axis=-1)
    out = b16(jnp.einsum("bhqk,bhkd->bhqd", b16(p), v))
    out = jnp.transpose(out, (0, 2, 1, 3)).reshape(bsz, seqlen, H * D)
    return (out @ wo).astype(x.dtype)


# ----------------------------------------------------------------------------
# Demo
# ----------------------------------------------------------------------------
if __name__ == "__main__":
    dim = 32
    n_heads = 4
    n_kv_heads = 2          # GQA: n_rep = 2
    head_dim = dim // n_heads
    bsz, seqlen = 2, 8
    max_batch_size, max_seq_len = 4, 16
    start_pos = 0
    rope_theta = 500000.0

    root = jax.random.PRNGKey(0)
    k_attn, k_x = jax.random.split(root)

    attn = Attention(dim, n_heads, n_kv_heads, max_batch_size, max_seq_len, k_attn)
    x = jax.random.normal(k_x, (bsz, seqlen, dim), jnp.float32)

    cos_full, sin_full = precompute_freqs_cis(head_dim, max_seq_len, rope_theta)
    cos = cos_full[start_pos: start_pos + seqlen]
    sin = sin_full[start_pos: start_pos + seqlen]

    out = attn(x, start_pos, cos, sin, causal=True)
    jax.block_until_ready(out)

    assert out.shape == (bsz, seqlen, dim)
    assert bool(jnp.all(jnp.isfinite(out)))

    ref = _reference_forward(attn, x, start_pos, cos, sin)
    assert bool(jnp.allclose(out, ref, atol=5e-2, rtol=5e-2))

    print("KERNEL_OK")
</pallas_src>

<mosaic_0001>
module attributes {stable_mosaic.version = 11 : i64} {
  func.func @_matmul_kernel(%arg0: i32, %arg1: i32, %arg2: i32, %arg3: memref<16x32xbf16, #tpu.memory_space<vmem>>, %arg4: memref<32x64xbf16, #tpu.memory_space<vmem>>, %arg5: memref<16x64xbf16, #tpu.memory_space<vmem>>, %arg6: memref<16x64xf32, #tpu.memory_space<vmem>>) attributes {dimension_semantics = [#tpu.dimension_semantics<parallel>, #tpu.dimension_semantics<parallel>, #tpu.dimension_semantics<arbitrary>], iteration_bounds = array<i64: 1, 1, 1>, scalar_prefetch = 0 : i64, scratch_operands = 1 : i64, tpu.core_type = #tpu.core_type<tc>, window_params = [{transform_indices = @transform_0, window_bounds = array<i64: 16, 32>}, {transform_indices = @transform_1, window_bounds = array<i64: 32, 64>}, {transform_indices = @transform_2, window_bounds = array<i64: 16, 64>}]} {
    %c0_i32 = arith.constant 0 : i32
    %0 = arith.cmpi eq, %arg2, %c0_i32 : i32
    %1 = arith.extui %0 : i1 to i32
    %c0_i32_0 = arith.constant 0 : i32
    %2 = arith.cmpi ne, %1, %c0_i32_0 : i32
    scf.if %2 {
      %cst_10 = arith.constant 0.000000e+00 : f32
      %12 = vector.broadcast %cst_10 : f32 to vector<16x64xf32>
      %c0_11 = arith.constant 0 : index
      %c0_12 = arith.constant 0 : index
      %13 = vector.load %arg6[%c0_11, %c0_12] : memref<16x64xf32, #tpu.memory_space<vmem>>, vector<16x64xf32>
      tpu.vector_store %arg6[%c0_11, %c0_12], %12 {strides = array<i32>} : memref<16x64xf32, #tpu.memory_space<vmem>>, vector<16x64xf32>,
    } else {
    }
    %c0 = arith.constant 0 : index
    %c0_1 = arith.constant 0 : index
    %3 = vector.load %arg6[%c0, %c0_1] : memref<16x64xf32, #tpu.memory_space<vmem>>, vector<16x64xf32>
    %c0_2 = arith.constant 0 : index
    %c0_3 = arith.constant 0 : index
    %4 = vector.load %arg3[%c0_2, %c0_3] : memref<16x32xbf16, #tpu.memory_space<vmem>>, vector<16x32xbf16>
    %c0_4 = arith.constant 0 : index
    %c0_5 = arith.constant 0 : index
    %5 = vector.load %arg4[%c0_4, %c0_5] : memref<32x64xbf16, #tpu.memory_space<vmem>>, vector<32x64xbf16>
    %cst = arith.constant dense<0.000000e+00> : vector<16x64xf32>
    %6 = tpu.matmul %4, %5, %cst {dimension_numbers = #tpu.dot_dimension_numbers<[1], [0], [0], [1], [0, 0, 1, 1], [], []>} : vector<16x32xbf16>, vector<32x64xbf16>, vector<16x64xf32> -> vector<16x64xf32>
    %7 = arith.addf %3, %6 : vector<16x64xf32>
    %c0_6 = arith.constant 0 : index
    %c0_7 = arith.constant 0 : index
    %8 = vector.load %arg6[%c0_6, %c0_7] : memref<16x64xf32, #tpu.memory_space<vmem>>, vector<16x64xf32>
    tpu.vector_store %arg6[%c0_6, %c0_7], %7 {strides = array<i32>} : memref<16x64xf32, #tpu.memory_space<vmem>>, vector<16x64xf32>,
    %c0_i32_8 = arith.constant 0 : i32
    %9 = arith.cmpi eq, %arg2, %c0_i32_8 : i32
    %10 = arith.extui %9 : i1 to i32
    %c0_i32_9 = arith.constant 0 : i32
    %11 = arith.cmpi ne, %10, %c0_i32_9 : i32
    scf.if %11 {
      %c0_10 = arith.constant 0 : index
      %c0_11 = arith.constant 0 : index
      %12 = vector.load %arg6[%c0_10, %c0_11] : memref<16x64xf32, #tpu.memory_space<vmem>>, vector<16x64xf32>
      %13 = arith.truncf %12 : vector<16x64xf32> to vector<16x64xbf16>
      %c0_12 = arith.constant 0 : index
      %c0_13 = arith.constant 0 : index
      %14 = vector.load %arg5[%c0_12, %c0_13] : memref<16x64xbf16, #tpu.memory_space<vmem>>, vector<16x64xbf16>
      tpu.vector_store %arg5[%c0_12, %c0_13], %13 {strides = array<i32>} : memref<16x64xbf16, #tpu.memory_space<vmem>>, vector<16x64xbf16>,
    } else {
    }
    return
  }
  func.func @transform_0(%arg0: i32, %arg1: i32, %arg2: i32) -> (i32, i32) {
    %c0_i32 = arith.constant 0 : i32
    return %arg0, %arg2 : i32, i32
  }
  func.func @transform_1(%arg0: i32, %arg1: i32, %arg2: i32) -> (i32, i32) {
    %c0_i32 = arith.constant 0 : i32
    return %arg2, %arg1 : i32, i32
  }
  func.func @transform_2(%arg0: i32, %arg1: i32, %arg2: i32) -> (i32, i32) {
    %c0_i32 = arith.constant 0 : i32
    return %arg0, %arg1 : i32, i32
  }
}

</mosaic_0001>

<llo_original>
// kernel: tpu_custom_call.1
$region0: #{tpu_custom_call.1}
  #allocation0 [shape = 'u32[]', space=smem, size = 0x4, offset = 0x4, fixed_abs, tag = 'smem constant byte address 0x4 - core index']
  #allocation1 [shape = 'u32[144,128]{1,0:T(1,128)}', space=vmem, size = 0x12000, scoped, tag = 'internal scratch']
  #allocation2 [shape = 'f32[16,64]{1,0:T(8,128)}', space=vmem, size = 0x2000, scoped, tag = 'scratch operand']
  %s0 = inlined_call_operand.hbm [shape: bf16[16,32], index: 0, kind: input, shape index: {}]
  %s1 = inlined_call_operand.hbm [shape: bf16[32,64], index: 1, kind: input, shape index: {}]
  %s2 = inlined_call_operand.hbm [shape: bf16[16,64], index: 2, kind: output, shape index: {}]
  %s3 = sld [smem:[#allocation0]]
  $region34: #{tpu_custom_call.1} parent=0
    _
  %s5 = ssub.s32 1, %s3
  %s6 = scalar_select 0, %s5, %s3
  $region1: #{tpu_custom_call.1} parent=0
    #allocation3 [shape = 'u8[4096]{0}', space=vmem, size = 0x1000, scoped, tag = 'input window, operand 0, single buffered']
    #allocation4 [shape = 's32[1]{0}', space=sflag, size = 0x4, scoped, tag = 'scoped memory for tpu_custom_call.1']
    #allocation5 [shape = 's32[1]{0}', space=sflag, size = 0x4, scoped, tag = 'scoped memory for tpu_custom_call.1']
    #allocation6 [shape = 'u8[8192]{0}', space=vmem, size = 0x2000, scoped, tag = 'input window, operand 1, single buffered']
    #allocation7 [shape = 's32[1]{0}', space=sflag, size = 0x4, scoped, tag = 'scoped memory for tpu_custom_call.1']
    #allocation8 [shape = 'u8[4096]{0}', space=vmem, size = 0x1000, scoped, tag = 'output window, operand 0, single buffered']
    %7 = vsyncpa [#allocation4], 0
    %8 = vsyncpa [#allocation7], 0
    %9 = vsyncpa [#allocation5], 0
    // Predicated region
    $region2: #{tpu_custom_call.1} parent=1 // pred_check
      _
    $region3: #{tpu_custom_call.1} parent=1 // pred_check_branch
      %11 = sbr.rel (0) target = $region5
    $region4: #{tpu_custom_call.1} parent=1 // pred_region
      %s13 = ssub.s32 128, 128
      %14 = vsyncadd [#allocation4], %s13
      %s15 = sshll.u32 [#allocation3], 4
      %s16 = int_to_ptr.vmem [resolvable:$true] %s15
      %21 = dma.hbm_to_vmem [thread:$0]  %s0, 128, %s16, [#allocation4], 64, 64, 4
    $region5: #{tpu_custom_call.1} parent=1 // pred_fallthru
      _
    // Predicated region
    $region6: #{tpu_custom_call.1} parent=1 // pred_check
      _
    $region7: #{tpu_custom_call.1} parent=1 // pred_check_branch
      %23 = sbr.rel (0) target = $region9
    $region8: #{tpu_custom_call.1} parent=1 // pred_region
      %s25 = ssub.s32 256, 256
      %26 = vsyncadd [#allocation7], %s25
      %s27 = sshll.u32 [#allocation6], 4
      %s28 = int_to_ptr.vmem [resolvable:$true] %s27
      %33 = dma.hbm_to_vmem [thread:$0]  %s1, 256, %s28, [#allocation7], 64, 64, 4
    $region9: #{tpu_custom_call.1} parent=1 // pred_fallthru
      _
    // Predicated region
    $region10: #{tpu_custom_call.1} parent=1 // pred_check
      _
    $region11: #{tpu_custom_call.1} parent=1 // pred_check_branch
      %35 = sbr.rel (0) target = $region13
    $region12: #{tpu_custom_call.1} parent=1 // pred_region
      %36 = dma.done [#allocation4], 128
    $region13: #{tpu_custom_call.1} parent=1 // pred_fallthru
      _
    // Predicated region
    $region14: #{tpu_custom_call.1} parent=1 // pred_check
      _
    $region15: #{tpu_custom_call.1} parent=1 // pred_check_branch
      %38 = sbr.rel (0) target = $region17
    $region16: #{tpu_custom_call.1} parent=1 // pred_region
      %39 = dma.done [#allocation7], 256
    $region17: #{tpu_custom_call.1} parent=1 // pred_fallthru
      _
    %p41 = scmp.eq.s32.totalorder 0, 0
    // Predicated region
    $region18: #{tpu_custom_call.1} parent=1 // pred_check
      %p42 = pneg %p41
    $region19: #{tpu_custom_call.1} parent=1 // pred_check_branch
      %44 = sbr.rel (%p42) target = $region21
    $region20: #{tpu_custom_call.1} parent=1 // pred_region
      %vm45 = vcmask 523264
      %46 = vst.msk [vmem:[#allocation2] sm:$0xff] %vm45, 0.0
      %47 = vst.msk [vmem:[#allocation2 + $0x8] sm:$0xff] %vm45, 0.0
    $region21: #{tpu_custom_call.1} parent=1 // pred_fallthru
      _
    %v48 = vld [vmem:[#allocation2] sm:$0xff]
    %v49 = vld [vmem:[#allocation2 + $0x8] sm:$0xff]
    %v50 = vld [vmem:[#allocation3] sm:$0xf]
    %v51 = vld [vmem:[#allocation3 + $0x4] sm:$0xf]
    %v52 = vld [vmem:[#allocation6] sm:$0xf]
    %v53 = vld [vmem:[#allocation6 + $0x4] sm:$0xf]
    %v54 = vld [vmem:[#allocation6 + $0x8] sm:$0xf]
    %v55 = vld [vmem:[#allocation6 + $0xc] sm:$0xf]
    %v58 = vunpack.c.l.b16 %v50
    %v59 = vunpack.c.l.b16 %v51
    %v60 = vpack.c.b16 %v59, %v58
    %v65 = vunpack.c.l.b16 %v52
    %v66 = vunpack.c.l.b16 %v53
    %v67 = vunpack.c.l.b16 %v54
    %v68 = vunpack.c.l.b16 %v55
    %v69 = vpack.c.b16 %v66, %v65
    %v70 = vpack.c.b16 %v68, %v67
    %vm73 = vcmask 261120
    %v75 = vsel %vm73, %v60, 0
    %77 = vmatprep.subr.bf16.mxu0 0
    %78 = vmatpush1.bf16.msra.mxu0 0
    %79 = vmatprep.subr.bf16.mxu0 0
    %80 = vmatpush1.bf16.msra.mxu0 0
    %81 = vmatprep.subr.bf16.mxu0 0
    %82 = vmatpush1.bf16.msra.mxu0 0
    %83 = vmatprep.subr.bf16.mxu0 0
    %84 = vmatpush1.bf16.msra.mxu0 0
    %85 = vmatprep.subr.bf16.mxu0 0
    %86 = vmatpush1.bf16.msra.mxu0 0
    %87 = vmatprep.subr.bf16.mxu0 0
    %88 = vmatpush1.bf16.msra.mxu0 0
    %89 = vmatprep.subr.bf16.mxu0 0
    %90 = vmatpush1.bf16.msra.mxu0 %v70
    %91 = vmatprep.subr.bf16.mxu0 0
    %92 = vmatpush1.bf16.msra.mxu0 %v69
    %93 = vmatprep.subr.bf16.mxu0 0
    %94 = vmatpush2.bf16.msra.mxu0 0
    %95 = vmatprep.subr.bf16.mxu0 0
    %96 = vmatpush2.bf16.msra.mxu0 0
    %97 = vmatprep.subr.bf16.mxu0 0
    %98 = vmatpush2.bf16.msra.mxu0 0
    %99 = vmatprep.subr.bf16.mxu0 0
    %100 = vmatpush2.bf16.msra.mxu0 0
    %101 = vmatprep.subr.bf16.mxu0 0
    %102 = vmatpush2.bf16.msra.mxu0 0
    %103 = vmatprep.subr.bf16.mxu0 0
    %104 = vmatpush2.bf16.msra.mxu0 0
    %105 = vmatprep.subr.bf16.mxu0 0
    %106 = vmatpush2.bf16.msra.mxu0 0
    %107 = vmatprep.subr.bf16.mxu0 0
    %108 = vmatpush2.bf16.msra.mxu0 0
    %109 = vmatprep.mubr.bf16.mxu0 0
    %110 = vmatmul.mubr.bf16.gmra.mxu0 %v75
    %v111 = vpop.f32.mrf.mxu0
    %v112 = vadd.f32 0.0, %v111
    %v113 = vpop.f32.mrf.mxu0
    %v114 = vpop.f32.mrf.mxu0
    %v115 = vadd.f32 0.0, %v114
    %v116 = vpop.f32.mrf.mxu0
    %117 = vdwg.mxu0
    %v118 = vadd.f32 %v48, %v112
    %v119 = vadd.f32 %v49, %v115
    %vm120 = vcmask 523264
    %121 = vst.msk [vmem:[#allocation2] sm:$0xff] %vm120, %v118
    %122 = vst.msk [vmem:[#allocation2 + $0x8] sm:$0xff] %vm120, %v119
    // Predicated region
    $region22: #{tpu_custom_call.1} parent=1 // pred_check
      %p123 = pneg %p41
    $region23: #{tpu_custom_call.1} parent=1 // pred_check_branch
      %125 = sbr.rel (%p123) target = $region25
    $region24: #{tpu_custom_call.1} parent=1 // pred_region
      %v126 = vld [vmem:[#allocation2] sm:$0xff]
      %v127 = vld [vmem:[#allocation2 + $0x8] sm:$0xff]
      %v128 = vpack.c.bf16 %v127, %v126
      %v130 = vunpack.c.l.b16 %v128
      %v131 = vunpack.c.h.b16 %v128
      %v132 = vpack.c.b16 %v130, %v130
      %v133 = vpack.c.b16 %v131, %v131
      %vm136 = vcmask 519168
      %137 = vst.msk [vmem:[#allocation8] sm:$0xf] %vm136, %v132
      %138 = vst.msk [vmem:[#allocation8 + $0x4] sm:$0xf] %vm136, %v133
    $region25: #{tpu_custom_call.1} parent=1 // pred_fallthru
      _
    // Predicated region
    $region26: #{tpu_custom_call.1} parent=1 // pred_check
      _
    $region27: #{tpu_custom_call.1} parent=1 // pred_check_branch
      %140 = sbr.rel (0) target = $region29
    $region28: #{tpu_custom_call.1} parent=1 // pred_region
      %s142 = ssub.s32 128, 128
      %143 = vsyncadd [#allocation5], %s142
      %s144 = sshll.u32 [#allocation8], 4
      %s145 = int_to_ptr.vmem [resolvable:$true] %s144
      %150 = dma.vmem_to_hbm [thread:$0]  %s145, 128, %s2, [#allocation5], 64, 64, 4
    $region29: #{tpu_custom_call.1} parent=1 // pred_fallthru
      _
    // Predicated region
    $region30: #{tpu_custom_call.1} parent=1 // pred_check
      _
    $region31: #{tpu_custom_call.1} parent=1 // pred_check_branch
      %152 = sbr.rel (0) target = $region33
    $region32: #{tpu_custom_call.1} parent=1 // pred_region
      %153 = dma.done [#allocation5], 128
    $region33: #{tpu_custom_call.1} parent=1 // pred_fallthru
      _
    %154 = vsyncpa [#allocation4], 1
    %155 = vsyncpa [#allocation7], 1
    %156 = vsyncpa [#allocation5], 1

</llo_original>
